<compile_context>
chip_gen: v5e
topology: v5e:2x2
jax: 0.10.0
libtpu: 0.0.40
codegen_flags: <defaults>
</compile_context>

<pallas_src>
import math

import jax
import jax.numpy as jnp
from jax.experimental import pallas as pl
from jax.experimental.pallas import tpu as pltpu

_LANE = 128


def _make_mask_kernel(slope: float, zero_prefix: int):
    """Kernel body with static config baked in.

    Input/output are a single lane-dense (1, pad_w) slab; the logits have
    already been shifted right by `zero_prefix` lanes in the wrapper, so the
    kernel does one sigmoid + one iota-masked select + one full unmasked store.
    """

    def kernel(logits_ref, out_ref):
        x = logits_ref[...]
        vals = jax.nn.sigmoid(jnp.float32(slope) * x)
        if zero_prefix > 0:
            lane = jax.lax.broadcasted_iota(jnp.int32, x.shape, dimension=1)
            vals = jnp.where(lane >= zero_prefix, vals, jnp.float32(0.0))
        out_ref[...] = vals.astype(out_ref.dtype)

    return kernel


def bi_line_constrained_prob_mask_lane_dense(
    logits: jax.Array,
    *,
    slope: float,
    preselect: bool,
    preselect_num: int,
) -> jax.Array:
    """Returns the mask as a lane-dense (1, W) array, W = L (+ preselect_num)."""
    length = logits.shape[0]
    prefix = preselect_num if preselect else 0
    out_w = length + prefix
    pad_w = _LANE * max(1, math.ceil(out_w / _LANE))

    # Pre-shift logits into their output lane position and pad the lane axis to
    # a multiple of 128. Pad values are irrelevant: prefix lanes are zeroed by
    # the kernel's iota mask, trailing pad lanes are sliced off below.
    logits_padded = jnp.pad(
        logits.astype(jnp.float32).reshape(1, length),
        ((0, 0), (prefix, pad_w - out_w)),
    )

    out_padded = pl.pallas_call(
        _make_mask_kernel(slope, prefix),
        out_shape=jax.ShapeDtypeStruct((1, pad_w), jnp.float32),
        in_specs=[pl.BlockSpec(memory_space=pltpu.MemorySpace.VMEM)],
        out_specs=pl.BlockSpec(memory_space=pltpu.MemorySpace.VMEM),
    )(logits_padded)

    return out_padded[:, :out_w]


def bi_line_constrained_prob_mask(
    logits: jax.Array,
    *,
    slope: float,
    preselect: bool,
    preselect_num: int,
) -> jax.Array:
    """PyTorch-layout forward: returns (1, 1, W, 1) float32 mask."""
    mask_2d = bi_line_constrained_prob_mask_lane_dense(
        logits, slope=slope, preselect=preselect, preselect_num=preselect_num
    )
    # PyTorch-compat layout only at the boundary; keep (1, W) internally.
    return mask_2d.reshape(1, 1, mask_2d.shape[1], 1)


def init_mask_logits(key, shape, slope, preselect, preselect_num, eps=0.01):
    """Deterministic re-implementation of _slope_random_uniform."""
    length = shape[0] - preselect_num if preselect else shape[0]
    temp = jax.random.uniform(
        key, (length,), minval=eps, maxval=1.0 - eps, dtype=jnp.float32
    )
    return -jnp.log(1.0 / temp - 1.0) / slope


def reference_forward(logits, slope, preselect, preselect_num):
    """Pure-JAX reference matching the PyTorch forward exactly."""
    mask = jax.nn.sigmoid(slope * logits).reshape(1, 1, logits.shape[0], 1)
    if preselect:
        zeros = jnp.zeros((1, 1, preselect_num, 1), dtype=mask.dtype)
        mask = jnp.concatenate([zeros, mask], axis=2)
    return mask


if __name__ == "__main__":
    key = jax.random.PRNGKey(0)
    k_logits, k_x = jax.random.split(key)

    # Module config (matches typical BiLineConstrainedProbMask usage).
    shape = [32]
    slope = 5.0
    preselect = True
    preselect_num = 2

    # Deterministic parameter init (synthetic, in-script). Length = 32 - 2 = 30.
    logits = init_mask_logits(k_logits, shape, slope, preselect, preselect_num)

    # Example NHWC input (only used for device/dtype context in the original).
    x = jax.random.normal(k_x, (2, 16, 32, 2), dtype=jnp.float32)

    out = bi_line_constrained_prob_mask(
        logits, slope=slope, preselect=preselect, preselect_num=preselect_num
    )
    out = jax.block_until_ready(out)

    ref = reference_forward(logits, slope, preselect, preselect_num)
    assert out.shape == (1, 1, shape[0], 1), out.shape
    assert jnp.allclose(out, ref, atol=1e-6, rtol=1e-6), "mismatch vs reference"

    # Also exercise the no-preselect path.
    out2 = bi_line_constrained_prob_mask(
        logits, slope=slope, preselect=False, preselect_num=0
    )
    out2 = jax.block_until_ready(out2)
    ref2 = reference_forward(logits, slope, False, 0)
    assert out2.shape == (1, 1, logits.shape[0], 1), out2.shape
    assert jnp.allclose(out2, ref2, atol=1e-6, rtol=1e-6), "mismatch (no preselect)"

    print("KERNEL_OK")
</pallas_src>

<mosaic_0001>
module attributes {stable_mosaic.version = 11 : i64} {
  func.func @kernel(%arg0: memref<1x128xf32, #tpu.memory_space<vmem>>, %arg1: memref<1x128xf32, #tpu.memory_space<vmem>>) attributes {dimension_semantics = [], scalar_prefetch = 0 : i64, scratch_operands = 0 : i64, tpu.core_type = #tpu.core_type<tc>} {
    %c0 = arith.constant 0 : index
    %c0_0 = arith.constant 0 : index
    %0 = vector.load %arg0[%c0, %c0_0] : memref<1x128xf32, #tpu.memory_space<vmem>>, vector<1x128xf32>
    %cst = arith.constant 5.000000e+00 : f32
    %1 = vector.broadcast %cst : f32 to vector<1x128xf32>
    %2 = arith.mulf %1, %0 : vector<1x128xf32>
    %3 = arith.negf %2 : vector<1x128xf32>
    %4 = math.exp %3 : vector<1x128xf32>
    %cst_1 = arith.constant 1.000000e+00 : f32
    %5 = vector.broadcast %cst_1 : f32 to vector<1x128xf32>
    %6 = arith.addf %5, %4 : vector<1x128xf32>
    %7 = arith.divf %5, %6 : vector<1x128xf32>
    %8 = tpu.iota {dimensions = array<i32: 1>} : vector<1x128xi32>
    %c2_i32 = arith.constant 2 : i32
    %9 = vector.broadcast %c2_i32 : i32 to vector<1x128xi32>
    %10 = arith.cmpi sge, %8, %9 : vector<1x128xi32>
    %cst_2 = arith.constant 0.000000e+00 : f32
    %11 = vector.broadcast %cst_2 : f32 to vector<1x128xf32>
    %12 = arith.select %10, %7, %11 : vector<1x128xi1>, vector<1x128xf32>
    %c0_3 = arith.constant 0 : index
    %c0_4 = arith.constant 0 : index
    %13 = vector.load %arg1[%c0_3, %c0_4] : memref<1x128xf32, #tpu.memory_space<vmem>>, vector<1x128xf32>
    tpu.vector_store %arg1[%c0_3, %c0_4], %12 {strides = array<i32>} : memref<1x128xf32, #tpu.memory_space<vmem>>, vector<1x128xf32>,
    return
  }
}

</mosaic_0001>

<llo_original>
// kernel: tpu_custom_call.1
$region0: #{tpu_custom_call.1}
  #allocation0 [shape = 'u32[]', space=smem, size = 0x4, offset = 0x4, fixed_abs, tag = 'smem constant byte address 0x4 - core index']
  #allocation1 [shape = 'u32[72,128]{1,0:T(1,128)}', space=vmem, size = 0x9000, scoped, tag = 'internal scratch']
  %s0 = inlined_call_operand.hbm [shape: f32[1,128], index: 0, kind: input, shape index: {}]
  %s1 = inlined_call_operand.hbm [shape: f32[1,128], index: 1, kind: output, shape index: {}]
  %s2 = sld [smem:[#allocation0]]
  $region18: #{tpu_custom_call.1} parent=0
    _
  %s4 = ssub.s32 1, %s2
  %s5 = scalar_select 0, %s4, %s2
  $region1: #{tpu_custom_call.1} parent=0
    #allocation2 [shape = 'u8[512]{0}', space=vmem, size = 0x400, scoped, tag = 'input window, operand 0, single buffered']
    #allocation3 [shape = 's32[1]{0}', space=sflag, size = 0x4, scoped, tag = 'scoped memory for tpu_custom_call.1']
    #allocation4 [shape = 's32[1]{0}', space=sflag, size = 0x4, scoped, tag = 'scoped memory for tpu_custom_call.1']
    #allocation5 [shape = 'u8[512]{0}', space=vmem, size = 0x400, scoped, tag = 'output window, operand 0, single buffered']
    %6 = vsyncpa [#allocation3], 0
    %7 = vsyncpa [#allocation4], 0
    // Predicated region
    $region2: #{tpu_custom_call.1} parent=1 // pred_check
      _
    $region3: #{tpu_custom_call.1} parent=1 // pred_check_branch
      %9 = sbr.rel (0) target = $region5
    $region4: #{tpu_custom_call.1} parent=1 // pred_region
      %11 = vsyncadd [#allocation3], 0
      %s13 = sshll.u32 %s0, 4
      %s14 = int_to_ptr.hbm [resolvable:$true] %s13
      %s15 = sshll.u32 [#allocation2], 4
      %s16 = int_to_ptr.vmem [resolvable:$true] %s15
      %18 = dma.hbm_to_vmem [thread:$0]  %s14, 16, %s16, [#allocation3]
    $region5: #{tpu_custom_call.1} parent=1 // pred_fallthru
      _
    // Predicated region
    $region6: #{tpu_custom_call.1} parent=1 // pred_check
      _
    $region7: #{tpu_custom_call.1} parent=1 // pred_check_branch
      %20 = sbr.rel (0) target = $region9
    $region8: #{tpu_custom_call.1} parent=1 // pred_region
      %22 = dma.done [#allocation3], 16
    $region9: #{tpu_custom_call.1} parent=1 // pred_fallthru
      _
    %v23 = vld [vmem:[#allocation2] sm:$0x1]
    %v24 = vmul.f32 %v23, 5.0
    %v25 = vxor.u32 %v24, 2147483648
    %v26 = vmul.f32 %v25, 1.442695
    %v27 = vpow.pop %v26
    %v28 = vadd.f32 %v27, 1.0
    %v29 = vrcp.pop %v28
    %v30 = vmul.f32 %v28, %v29
    %v31 = vsub.f32 1.0, %v30
    %v32 = vmul.f32 %v29, %v31
    %v33 = vadd.f32 %v29, %v32
    %vm34 = vweird.f32 %v28
    %vm35 = vweird.f32 %v29
    %vm36 = vmor %vm34, %vm35
    %v37 = vsel %vm36, %v29, %v33
    %v38 = vand.u32 2147483647, %v28
    %vm39 = vcmp.eq.f32.partialorder %v38, 8.507059e+37
    %v40 = vand.u32 %v28, 2147483648
    %v41 = vor.u32 1.1754944e-38, %v40
    %v42 = vsel %vm39, %v41, %v37
    %v43 = vmul.f32 1.0, %v42
    %v44 = vlaneseq
    %v45 = vand.u32 %v44, 127
    %vm46 = vcmp.ge.s32.totalorder %v45, 2
    %v47 = vsel %vm46, %v43, 0.0
    %48 = vst [vmem:[#allocation5] sm:$0x1] %v47
    // Predicated region
    $region10: #{tpu_custom_call.1} parent=1 // pred_check
      _
    $region11: #{tpu_custom_call.1} parent=1 // pred_check_branch
      %50 = sbr.rel (0) target = $region13
    $region12: #{tpu_custom_call.1} parent=1 // pred_region
      %52 = vsyncadd [#allocation4], 0
      %s54 = sshll.u32 [#allocation5], 4
      %s55 = int_to_ptr.vmem [resolvable:$true] %s54
      %s56 = sshll.u32 %s1, 4
      %s57 = int_to_ptr.hbm [resolvable:$true] %s56
      %59 = dma.vmem_to_hbm [thread:$0]  %s55, 16, %s57, [#allocation4]
    $region13: #{tpu_custom_call.1} parent=1 // pred_fallthru
      _
    // Predicated region
    $region14: #{tpu_custom_call.1} parent=1 // pred_check
      _
    $region15: #{tpu_custom_call.1} parent=1 // pred_check_branch
      %61 = sbr.rel (0) target = $region17
    $region16: #{tpu_custom_call.1} parent=1 // pred_region
      %63 = dma.done [#allocation4], 16
    $region17: #{tpu_custom_call.1} parent=1 // pred_fallthru
      _
    %64 = vsyncpa [#allocation3], 1
    %65 = vsyncpa [#allocation4], 1

</llo_original>
